<compile_context>
chip_gen: v6e
topology: v6e:2x2x1
jax: 0.10.0
libtpu: 0.0.40
codegen_flags: <defaults>
</compile_context>

<pallas_src>
import functools
import math

import jax
import jax.numpy as jnp
from jax import lax
from jax.experimental import pallas as pl
from jax.experimental.pallas import tpu as pltpu


def _lora_kernel(x_ref, w_ref, za_ref, b_ref, bias_ref, o_ref, acc_ref, *,
                 scaling):
    # x_ref   : (tm, tk)   activation tile
    # w_ref   : (tn, tk)   weight tile, native (out, in) layout
    # za_ref  : (tm, r)    precomputed x @ A.T tile (f32), tiled over i only
    # b_ref   : (tn, r)    lora_B tile, native (out, r) layout
    # bias_ref: (1, tn)    bias tile (zeros if the module has no bias)
    # o_ref   : (tm, tn)   output tile
    # acc_ref : (tm, tn)   f32 accumulator scratch, lives across the K loop
    k = pl.program_id(2)
    nk = pl.num_programs(2)

    @pl.when(k == 0)
    def _():
        acc_ref[...] = jnp.zeros_like(acc_ref)

    # base_out accumulation: contract K (last dim of both x and W) on the MXU.
    acc_ref[...] += lax.dot_general(
        x_ref[...], w_ref[...],
        dimension_numbers=(((1,), (1,)), ((), ())),
        preferred_element_type=jnp.float32)

    @pl.when(k == nk - 1)
    def _():
        # LoRA up-projection, scaling and bias fused into the final K step,
        # so the LoRA contribution is added exactly once per (i, j) tile.
        lora = lax.dot_general(
            za_ref[...], b_ref[...].astype(jnp.float32),
            dimension_numbers=(((1,), (1,)), ((), ())),
            preferred_element_type=jnp.float32)
        out = acc_ref[...] + scaling * lora + bias_ref[...].astype(jnp.float32)
        o_ref[...] = out.astype(o_ref.dtype)


def lora_linear(x, weight, lora_A, lora_B, *, alpha=1.0, bias=None,
                tm=256, tn=512, tk=512):
    """x: (..., in_features); weight: (out, in); lora_A: (r, in); lora_B: (out, r)."""
    out_features, in_features = weight.shape
    r = lora_A.shape[0]
    scaling = float(alpha) / float(r)

    lead = x.shape[:-1]
    M = int(math.prod(lead)) if lead else 1
    K, N = in_features, out_features

    x2d = x.reshape(M, K)

    # Hoisted LoRA down-projection: tiny (M, r) intermediate, computed once
    # (kept in f32) instead of once per (N, K) tile inside the kernel.
    za = jnp.einsum("mk,rk->mr", x2d, lora_A,
                    preferred_element_type=jnp.float32)

    # Tile sizes: use the full dimension when small, otherwise an (8,128)-
    # friendly tile that fits comfortably in VMEM on v5e/v6e/v7x.
    tm = M if M <= tm else tm
    tn = N if N <= tn else tn
    tk = K if K <= tk else tk

    Mp = ((M + tm - 1) // tm) * tm
    Np = ((N + tn - 1) // tn) * tn
    Kp = ((K + tk - 1) // tk) * tk

    # Zero-padding contributes nothing to the contractions; padded output
    # rows/cols are sliced off below.  No-op when shapes are already aligned.
    x_p = jnp.pad(x2d, ((0, Mp - M), (0, Kp - K)))
    w_p = jnp.pad(weight, ((0, Np - N), (0, Kp - K)))
    za_p = jnp.pad(za, ((0, Mp - M), (0, 0)))
    b_p = jnp.pad(lora_B, ((0, Np - N), (0, 0)))
    if bias is None:
        bias_p = jnp.zeros((1, Np), jnp.float32)
    else:
        bias_p = jnp.pad(bias.reshape(1, N).astype(jnp.float32),
                         ((0, 0), (0, Np - N)))

    grid = (Mp // tm, Np // tn, Kp // tk)

    itemsize = jnp.dtype(x.dtype).itemsize
    cost = pl.CostEstimate(
        flops=2 * Mp * Np * Kp + 2 * Mp * Np * r,
        transcendentals=0,
        bytes_accessed=(x_p.size * itemsize + w_p.size * w_p.dtype.itemsize
                        + za_p.size * 4 + b_p.size * b_p.dtype.itemsize
                        + bias_p.size * 4 + Mp * Np * itemsize),
    )

    out2d = pl.pallas_call(
        functools.partial(_lora_kernel, scaling=scaling),
        out_shape=jax.ShapeDtypeStruct((Mp, Np), x.dtype),
        grid_spec=pltpu.PrefetchScalarGridSpec(
            num_scalar_prefetch=0,
            grid=grid,
            in_specs=[
                pl.BlockSpec((tm, tk), lambda i, j, k: (i, k)),   # x
                pl.BlockSpec((tn, tk), lambda i, j, k: (j, k)),   # W (out, in)
                pl.BlockSpec((tm, r), lambda i, j, k: (i, 0)),    # ZA (M, r)
                pl.BlockSpec((tn, r), lambda i, j, k: (j, 0)),    # lora_B (out, r)
                pl.BlockSpec((1, tn), lambda i, j, k: (0, j)),    # bias (1, N)
            ],
            out_specs=pl.BlockSpec((tm, tn), lambda i, j, k: (i, j)),
            scratch_shapes=[pltpu.VMEM((tm, tn), jnp.float32)],
        ),
        compiler_params=pltpu.CompilerParams(
            dimension_semantics=("parallel", "parallel", "arbitrary")),
        cost_estimate=cost,
    )(x_p, w_p, za_p, b_p, bias_p)

    out2d = out2d[:M, :N]
    return out2d.reshape(*lead, N)


def _kaiming_uniform(key, shape, fan_in):
    # nn.init.kaiming_uniform_ with a=sqrt(5): bound = 1/sqrt(fan_in)
    bound = 1.0 / math.sqrt(fan_in)
    return jax.random.uniform(key, shape, jnp.float32, minval=-bound, maxval=bound)


if __name__ == "__main__":
    batch, seq = 2, 8
    in_features, out_features, r, alpha = 32, 64, 4, 1.0

    key = jax.random.PRNGKey(0)
    kx, kw, ka = jax.random.split(key, 3)

    x = jax.random.normal(kx, (batch, seq, in_features), jnp.float32)
    weight = _kaiming_uniform(kw, (out_features, in_features), in_features)
    # Module inits lora_A with kaiming, lora_B with zeros; use nonzero lora_B
    # here so the LoRA path is actually exercised by the check.
    lora_A = _kaiming_uniform(ka, (r, in_features), in_features)
    lora_B = _kaiming_uniform(jax.random.PRNGKey(1), (out_features, r), r)

    y = lora_linear(x, weight, lora_A, lora_B, alpha=alpha, bias=None)
    y = jax.block_until_ready(y)

    # Reference (plain JAX) check of exact forward semantics.
    base_ref = jnp.einsum("bsi,oi->bso", x, weight)
    lora_ref = jnp.einsum("bsr,or->bso",
                          jnp.einsum("bsi,ri->bsr", x, lora_A), lora_B)
    y_ref = base_ref + (alpha / r) * lora_ref
    assert y.shape == (batch, seq, out_features)
    assert jnp.allclose(y, y_ref, atol=1e-5, rtol=1e-5)

    print("KERNEL_OK")
</pallas_src>

<mosaic_0001>
module attributes {stable_mosaic.version = 11 : i64} {
  func.func @_lora_kernel(%arg0: i32, %arg1: i32, %arg2: i32, %arg3: memref<16x32xf32, #tpu.memory_space<vmem>>, %arg4: memref<64x32xf32, #tpu.memory_space<vmem>>, %arg5: memref<16x4xf32, #tpu.memory_space<vmem>>, %arg6: memref<64x4xf32, #tpu.memory_space<vmem>>, %arg7: memref<1x64xf32, #tpu.memory_space<vmem>>, %arg8: memref<16x64xf32, #tpu.memory_space<vmem>>, %arg9: memref<16x64xf32, #tpu.memory_space<vmem>>) attributes {dimension_semantics = [#tpu.dimension_semantics<parallel>, #tpu.dimension_semantics<parallel>, #tpu.dimension_semantics<arbitrary>], iteration_bounds = array<i64: 1, 1, 1>, scalar_prefetch = 0 : i64, scratch_operands = 1 : i64, tpu.core_type = #tpu.core_type<tc>, window_params = [{transform_indices = @transform_0, window_bounds = array<i64: 16, 32>}, {transform_indices = @transform_1, window_bounds = array<i64: 64, 32>}, {transform_indices = @transform_2, window_bounds = array<i64: 16, 4>}, {transform_indices = @transform_3, window_bounds = array<i64: 64, 4>}, {transform_indices = @transform_4, window_bounds = array<i64: 1, 64>}, {transform_indices = @transform_5, window_bounds = array<i64: 16, 64>}]} {
    %c0_i32 = arith.constant 0 : i32
    %0 = arith.cmpi eq, %arg2, %c0_i32 : i32
    %1 = arith.extui %0 : i1 to i32
    %c0_i32_0 = arith.constant 0 : i32
    %2 = arith.cmpi ne, %1, %c0_i32_0 : i32
    scf.if %2 {
      %cst_10 = arith.constant 0.000000e+00 : f32
      %12 = vector.broadcast %cst_10 : f32 to vector<16x64xf32>
      %c0_11 = arith.constant 0 : index
      %c0_12 = arith.constant 0 : index
      %13 = vector.load %arg9[%c0_11, %c0_12] : memref<16x64xf32, #tpu.memory_space<vmem>>, vector<16x64xf32>
      tpu.vector_store %arg9[%c0_11, %c0_12], %12 {strides = array<i32>} : memref<16x64xf32, #tpu.memory_space<vmem>>, vector<16x64xf32>,
    } else {
    }
    %c0 = arith.constant 0 : index
    %c0_1 = arith.constant 0 : index
    %3 = vector.load %arg9[%c0, %c0_1] : memref<16x64xf32, #tpu.memory_space<vmem>>, vector<16x64xf32>
    %c0_2 = arith.constant 0 : index
    %c0_3 = arith.constant 0 : index
    %4 = vector.load %arg3[%c0_2, %c0_3] : memref<16x32xf32, #tpu.memory_space<vmem>>, vector<16x32xf32>
    %c0_4 = arith.constant 0 : index
    %c0_5 = arith.constant 0 : index
    %5 = vector.load %arg4[%c0_4, %c0_5] : memref<64x32xf32, #tpu.memory_space<vmem>>, vector<64x32xf32>
    %cst = arith.constant dense<0.000000e+00> : vector<16x64xf32>
    %6 = tpu.matmul %4, %5, %cst {dimension_numbers = #tpu.dot_dimension_numbers<[1], [1], [0], [0], [0, 0, 1, 0], [], []>} : vector<16x32xf32>, vector<64x32xf32>, vector<16x64xf32> -> vector<16x64xf32>
    %7 = arith.addf %3, %6 : vector<16x64xf32>
    %c0_6 = arith.constant 0 : index
    %c0_7 = arith.constant 0 : index
    %8 = vector.load %arg9[%c0_6, %c0_7] : memref<16x64xf32, #tpu.memory_space<vmem>>, vector<16x64xf32>
    tpu.vector_store %arg9[%c0_6, %c0_7], %7 {strides = array<i32>} : memref<16x64xf32, #tpu.memory_space<vmem>>, vector<16x64xf32>,
    %c0_i32_8 = arith.constant 0 : i32
    %9 = arith.cmpi eq, %arg2, %c0_i32_8 : i32
    %10 = arith.extui %9 : i1 to i32
    %c0_i32_9 = arith.constant 0 : i32
    %11 = arith.cmpi ne, %10, %c0_i32_9 : i32
    scf.if %11 {
      %c0_10 = arith.constant 0 : index
      %c0_11 = arith.constant 0 : index
      %12 = vector.load %arg5[%c0_10, %c0_11] : memref<16x4xf32, #tpu.memory_space<vmem>>, vector<16x4xf32>
      %c0_12 = arith.constant 0 : index
      %c0_13 = arith.constant 0 : index
      %13 = vector.load %arg6[%c0_12, %c0_13] : memref<64x4xf32, #tpu.memory_space<vmem>>, vector<64x4xf32>
      %cst_14 = arith.constant dense<0.000000e+00> : vector<16x64xf32>
      %14 = tpu.matmul %12, %13, %cst_14 {dimension_numbers = #tpu.dot_dimension_numbers<[1], [1], [0], [0], [0, 0, 1, 0], [], []>} : vector<16x4xf32>, vector<64x4xf32>, vector<16x64xf32> -> vector<16x64xf32>
      %c0_15 = arith.constant 0 : index
      %c0_16 = arith.constant 0 : index
      %15 = vector.load %arg9[%c0_15, %c0_16] : memref<16x64xf32, #tpu.memory_space<vmem>>, vector<16x64xf32>
      %cst_17 = arith.constant 2.500000e-01 : f32
      %16 = vector.broadcast %cst_17 : f32 to vector<16x64xf32>
      %17 = arith.mulf %16, %14 : vector<16x64xf32>
      %18 = arith.addf %15, %17 : vector<16x64xf32>
      %c0_18 = arith.constant 0 : index
      %c0_19 = arith.constant 0 : index
      %19 = vector.load %arg7[%c0_18, %c0_19] : memref<1x64xf32, #tpu.memory_space<vmem>>, vector<1x64xf32>
      %20 = vector.broadcast %19 : vector<1x64xf32> to vector<16x64xf32>
      %21 = arith.addf %18, %20 : vector<16x64xf32>
      %c0_20 = arith.constant 0 : index
      %c0_21 = arith.constant 0 : index
      %22 = vector.load %arg8[%c0_20, %c0_21] : memref<16x64xf32, #tpu.memory_space<vmem>>, vector<16x64xf32>
      tpu.vector_store %arg8[%c0_20, %c0_21], %21 {strides = array<i32>} : memref<16x64xf32, #tpu.memory_space<vmem>>, vector<16x64xf32>,
    } else {
    }
    return
  }
  func.func @transform_0(%arg0: i32, %arg1: i32, %arg2: i32) -> (i32, i32) {
    %c0_i32 = arith.constant 0 : i32
    return %arg0, %arg2 : i32, i32
  }
  func.func @transform_1(%arg0: i32, %arg1: i32, %arg2: i32) -> (i32, i32) {
    %c0_i32 = arith.constant 0 : i32
    return %arg1, %arg2 : i32, i32
  }
  func.func @transform_2(%arg0: i32, %arg1: i32, %arg2: i32) -> (i32, i32) {
    %c0_i32 = arith.constant 0 : i32
    %c0_i32_0 = arith.constant 0 : i32
    return %arg0, %c0_i32 : i32, i32
  }
  func.func @transform_3(%arg0: i32, %arg1: i32, %arg2: i32) -> (i32, i32) {
    %c0_i32 = arith.constant 0 : i32
    %c0_i32_0 = arith.constant 0 : i32
    return %arg1, %c0_i32 : i32, i32
  }
  func.func @transform_4(%arg0: i32, %arg1: i32, %arg2: i32) -> (i32, i32) {
    %c0_i32 = arith.constant 0 : i32
    %c0_i32_0 = arith.constant 0 : i32
    return %c0_i32, %arg1 : i32, i32
  }
  func.func @transform_5(%arg0: i32, %arg1: i32, %arg2: i32) -> (i32, i32) {
    %c0_i32 = arith.constant 0 : i32
    return %arg0, %arg1 : i32, i32
  }
}

</mosaic_0001>

<llo_original>
// kernel: tpu_custom_call.1
$region0: #{tpu_custom_call.1}
  #allocation0 [shape = 'u32[]', space=smem, size = 0x4, offset = 0x4, fixed_abs, tag = 'smem constant byte address 0x4 - core index']
  #allocation1 [shape = 'u32[144,128]{1,0:T(1,128)}', space=vmem, size = 0x12000, scoped, tag = 'internal scratch']
  #allocation2 [shape = 'f32[16,64]{1,0:T(8,128)}', space=vmem, size = 0x2000, scoped, tag = 'scratch operand']
  %s0 = inlined_call_operand.vmem [shape: f32[16,32], index: 0, kind: input, shape index: {}]
  %s1 = inlined_call_operand.vmem [shape: f32[64,32], index: 1, kind: input, shape index: {}]
  %s2 = inlined_call_operand.vmem [shape: f32[16,4], index: 2, kind: input, shape index: {}]
  %s3 = inlined_call_operand.vmem [shape: f32[64,4], index: 3, kind: input, shape index: {}]
  %s4 = inlined_call_operand.vmem [shape: f32[1,64], index: 4, kind: input, shape index: {}]
  %s5 = inlined_call_operand.hbm [shape: f32[16,64], index: 5, kind: output, shape index: {}]
  %s6 = sld [smem:[#allocation0]]
  $region38: #{tpu_custom_call.1} parent=0
    _
  %s8 = ssub.s32 1, %s6
  %s9 = scalar_select 0, %s8, %s6
  $region1: #{tpu_custom_call.1} parent=0
    #allocation3 [shape = 'u8[8192]{0}', space=vmem, size = 0x2000, scoped, tag = 'output window, operand 0, single buffered']
    #allocation4 [shape = 's32[1]{0}', space=sflag, size = 0x4, scoped, tag = 'scoped memory for tpu_custom_call.1']
    %10 = vsyncpa [#allocation4], 0
    // Predicated region
    $region2: #{tpu_custom_call.1} parent=1 // pred_check
      _
    $region3: #{tpu_custom_call.1} parent=1 // pred_check_branch
      %12 = sbr.rel (0) target = $region5
    $region4: #{tpu_custom_call.1} parent=1 // pred_region
      _
    $region5: #{tpu_custom_call.1} parent=1 // pred_fallthru
      _
    // Predicated region
    $region6: #{tpu_custom_call.1} parent=1 // pred_check
      _
    $region7: #{tpu_custom_call.1} parent=1 // pred_check_branch
      %14 = sbr.rel (0) target = $region9
    $region8: #{tpu_custom_call.1} parent=1 // pred_region
      _
    $region9: #{tpu_custom_call.1} parent=1 // pred_fallthru
      _
    // Predicated region
    $region10: #{tpu_custom_call.1} parent=1 // pred_check
      _
    $region11: #{tpu_custom_call.1} parent=1 // pred_check_branch
      %16 = sbr.rel (0) target = $region13
    $region12: #{tpu_custom_call.1} parent=1 // pred_region
      _
    $region13: #{tpu_custom_call.1} parent=1 // pred_fallthru
      _
    // Predicated region
    $region14: #{tpu_custom_call.1} parent=1 // pred_check
      _
    $region15: #{tpu_custom_call.1} parent=1 // pred_check_branch
      %18 = sbr.rel (0) target = $region17
    $region16: #{tpu_custom_call.1} parent=1 // pred_region
      _
    $region17: #{tpu_custom_call.1} parent=1 // pred_fallthru
      _
    // Predicated region
    $region18: #{tpu_custom_call.1} parent=1 // pred_check
      _
    $region19: #{tpu_custom_call.1} parent=1 // pred_check_branch
      %20 = sbr.rel (0) target = $region21
    $region20: #{tpu_custom_call.1} parent=1 // pred_region
      _
    $region21: #{tpu_custom_call.1} parent=1 // pred_fallthru
      _
    %p21 = scmp.eq.s32.totalorder 0, 0
    // Predicated region
    $region22: #{tpu_custom_call.1} parent=1 // pred_check
      %p22 = pneg %p21
    $region23: #{tpu_custom_call.1} parent=1 // pred_check_branch
      %24 = sbr.rel (%p22) target = $region25
    $region24: #{tpu_custom_call.1} parent=1 // pred_region
      %vm25 = vcmask 523264
      %26 = vst.msk [vmem:[#allocation2] sm:$0xff] %vm25, 0.0
      %27 = vst.msk [vmem:[#allocation2 + $0x8] sm:$0xff] %vm25, 0.0
    $region25: #{tpu_custom_call.1} parent=1 // pred_fallthru
      _
    %v28 = vld [vmem:[#allocation2] sm:$0xff]
    %v29 = vld [vmem:[#allocation2 + $0x8] sm:$0xff]
    %v30 = vld [vmem:[%s0] sm:$0xff]
    %v31 = vld [vmem:[%s0 + $0x8] sm:$0xff]
    %v32 = vld [vmem:[%s1] sm:$0xff]
    %v33 = vld [vmem:[%s1 + $0x8] sm:$0xff]
    %v34 = vld [vmem:[%s1 + $0x10] sm:$0xff]
    %v35 = vld [vmem:[%s1 + $0x18] sm:$0xff]
    %v36 = vld [vmem:[%s1 + $0x20] sm:$0xff]
    %v37 = vld [vmem:[%s1 + $0x28] sm:$0xff]
    %v38 = vld [vmem:[%s1 + $0x30] sm:$0xff]
    %v39 = vld [vmem:[%s1 + $0x38] sm:$0xff]
    %vm40 = vcmask 261120
    %v42 = vsel %vm40, %v30, 0
    %v45 = vsel %vm40, %v31, 0
    %v48 = vsel %vm40, %v32, 0
    %v51 = vsel %vm40, %v33, 0
    %v54 = vsel %vm40, %v34, 0
    %v57 = vsel %vm40, %v35, 0
    %v60 = vsel %vm40, %v36, 0
    %v63 = vsel %vm40, %v37, 0
    %v66 = vsel %vm40, %v38, 0
    %v69 = vsel %vm40, %v39, 0
    %71 = vmatprep.subr.mxu0 0.0
    %72 = vmatpush1.xpose.msra.mxu0 0.0
    %73 = vmatprep.subr.mxu0 0.0
    %74 = vmatpush1.xpose.msra.mxu0 0.0
    %75 = vmatprep.subr.mxu0 0.0
    %76 = vmatpush1.xpose.msra.mxu0 0.0
    %77 = vmatprep.subr.mxu0 0.0
    %78 = vmatpush1.xpose.msra.mxu0 0.0
    %79 = vmatprep.subr.mxu0 0.0
    %80 = vmatpush1.xpose.msra.mxu0 0.0
    %81 = vmatprep.subr.mxu0 0.0
    %82 = vmatpush1.xpose.msra.mxu0 0.0
    %83 = vmatprep.subr.mxu0 0.0
    %84 = vmatpush1.xpose.msra.mxu0 0.0
    %85 = vmatprep.subr.mxu0 0.0
    %86 = vmatpush1.xpose.msra.mxu0 0.0
    %87 = vmatprep.subr.mxu0 0.0
    %88 = vmatpush1.xpose.msra.mxu0 %v69
    %89 = vmatprep.subr.mxu0 0.0
    %90 = vmatpush1.xpose.msra.mxu0 %v66
    %91 = vmatprep.subr.mxu0 0.0
    %92 = vmatpush1.xpose.msra.mxu0 %v63
    %93 = vmatprep.subr.mxu0 0.0
    %94 = vmatpush1.xpose.msra.mxu0 %v60
    %95 = vmatprep.subr.mxu0 0.0
    %96 = vmatpush1.xpose.msra.mxu0 %v57
    %97 = vmatprep.subr.mxu0 0.0
    %98 = vmatpush1.xpose.msra.mxu0 %v54
    %99 = vmatprep.subr.mxu0 0.0
    %100 = vmatpush1.xpose.msra.mxu0 %v51
    %101 = vmatprep.subr.mxu0 0.0
    %102 = vmatpush1.xpose.msra.mxu0 %v48
    %103 = vmatprep.subr.mxu0 0.0
    %104 = vmatpush2.xpose.msra.mxu0 0.0
    %105 = vmatprep.subr.mxu0 0.0
    %106 = vmatpush2.xpose.msra.mxu0 0.0
    %107 = vmatprep.subr.mxu0 0.0
    %108 = vmatpush2.xpose.msra.mxu0 0.0
    %109 = vmatprep.subr.mxu0 0.0
    %110 = vmatpush2.xpose.msra.mxu0 0.0
    %111 = vmatprep.subr.mxu0 0.0
    %112 = vmatpush2.xpose.msra.mxu0 0.0
    %113 = vmatprep.subr.mxu0 0.0
    %114 = vmatpush2.xpose.msra.mxu0 0.0
    %115 = vmatprep.subr.mxu0 0.0
    %116 = vmatpush2.xpose.msra.mxu0 0.0
    %117 = vmatprep.subr.mxu0 0.0
    %118 = vmatpush2.xpose.msra.mxu0 0.0
    %119 = vmatprep.subr.mxu0 0.0
    %120 = vmatpush2.xpose.msra.mxu0 0.0
    %121 = vmatprep.subr.mxu0 0.0
    %122 = vmatpush2.xpose.msra.mxu0 0.0
    %123 = vmatprep.subr.mxu0 0.0
    %124 = vmatpush2.xpose.msra.mxu0 0.0
    %125 = vmatprep.subr.mxu0 0.0
    %126 = vmatpush2.xpose.msra.mxu0 0.0
    %127 = vmatprep.subr.mxu0 0.0
    %128 = vmatpush2.xpose.msra.mxu0 0.0
    %129 = vmatprep.subr.mxu0 0.0
    %130 = vmatpush2.xpose.msra.mxu0 0.0
    %131 = vmatprep.subr.mxu0 0.0
    %132 = vmatpush2.xpose.msra.mxu0 0.0
    %133 = vmatprep.subr.mxu0 0.0
    %134 = vmatpush2.xpose.msra.mxu0 0.0
    %135 = vmatprep.mubr.f32.mxu0 0.0
    %136 = vmatmul.mubr.f32.gmra.mxu0 %v42
    %v137 = vpop.f32.mrf.mxu0
    %v138 = vadd.f32 0.0, %v137
    %v139 = vpop.f32.mrf.mxu0
    %140 = vmatprep.mubr.f32.mxu0 0.0
    %141 = vmatmul.mubr.f32.gmra.mxu0 %v45
    %v142 = vpop.f32.mrf.mxu0
    %v143 = vadd.f32 0.0, %v142
    %v144 = vpop.f32.mrf.mxu0
    %145 = vdwg.mxu0
    %v146 = vadd.f32 %v28, %v138
    %v147 = vadd.f32 %v29, %v143
    %vm148 = vcmask 523264
    %149 = vst.msk [vmem:[#allocation2] sm:$0xff] %vm148, %v146
    %150 = vst.msk [vmem:[#allocation2 + $0x8] sm:$0xff] %vm148, %v147
    // Predicated region
    $region26: #{tpu_custom_call.1} parent=1 // pred_check
      %p151 = pneg %p21
    $region27: #{tpu_custom_call.1} parent=1 // pred_check_branch
      %153 = sbr.rel (%p151) target = $region29
    $region28: #{tpu_custom_call.1} parent=1 // pred_region
      %v154 = vld [vmem:[%s2] sm:$0xff]
      %v155 = vld [vmem:[%s2 + $0x8] sm:$0xff]
      %v156 = vld [vmem:[%s3] sm:$0xff]
      %v157 = vld [vmem:[%s3 + $0x8] sm:$0xff]
      %v158 = vld [vmem:[%s3 + $0x10] sm:$0xff]
      %v159 = vld [vmem:[%s3 + $0x18] sm:$0xff]
      %v160 = vld [vmem:[%s3 + $0x20] sm:$0xff]
      %v161 = vld [vmem:[%s3 + $0x28] sm:$0xff]
      %v162 = vld [vmem:[%s3 + $0x30] sm:$0xff]
      %v163 = vld [vmem:[%s3 + $0x38] sm:$0xff]
      %vm164 = vcmask 31744
      %v166 = vsel %vm164, %v154, 0
      %v169 = vsel %vm164, %v155, 0
      %v172 = vsel %vm164, %v156, 0
      %v175 = vsel %vm164, %v157, 0
      %v178 = vsel %vm164, %v158, 0
      %v181 = vsel %vm164, %v159, 0
      %v184 = vsel %vm164, %v160, 0
      %v187 = vsel %vm164, %v161, 0
      %v190 = vsel %vm164, %v162, 0
      %v193 = vsel %vm164, %v163, 0
      %195 = vmatprep.subr.mxu0 0.0
      %196 = vmatpush1.xpose.msra.mxu0 0.0
      %197 = vmatprep.subr.mxu0 0.0
      %198 = vmatpush1.xpose.msra.mxu0 0.0
      %199 = vmatprep.subr.mxu0 0.0
      %200 = vmatpush1.xpose.msra.mxu0 0.0
      %201 = vmatprep.subr.mxu0 0.0
      %202 = vmatpush1.xpose.msra.mxu0 0.0
      %203 = vmatprep.subr.mxu0 0.0
      %204 = vmatpush1.xpose.msra.mxu0 0.0
      %205 = vmatprep.subr.mxu0 0.0
      %206 = vmatpush1.xpose.msra.mxu0 0.0
      %207 = vmatprep.subr.mxu0 0.0
      %208 = vmatpush1.xpose.msra.mxu0 0.0
      %209 = vmatprep.subr.mxu0 0.0
      %210 = vmatpush1.xpose.msra.mxu0 0.0
      %211 = vmatprep.subr.mxu0 0.0
      %212 = vmatpush1.xpose.msra.mxu0 %v193
      %213 = vmatprep.subr.mxu0 0.0
      %214 = vmatpush1.xpose.msra.mxu0 %v190
      %215 = vmatprep.subr.mxu0 0.0
      %216 = vmatpush1.xpose.msra.mxu0 %v187
      %217 = vmatprep.subr.mxu0 0.0
      %218 = vmatpush1.xpose.msra.mxu0 %v184
      %219 = vmatprep.subr.mxu0 0.0
      %220 = vmatpush1.xpose.msra.mxu0 %v181
      %221 = vmatprep.subr.mxu0 0.0
      %222 = vmatpush1.xpose.msra.mxu0 %v178
      %223 = vmatprep.subr.mxu0 0.0
      %224 = vmatpush1.xpose.msra.mxu0 %v175
      %225 = vmatprep.subr.mxu0 0.0
      %226 = vmatpush1.xpose.msra.mxu0 %v172
      %227 = vmatprep.subr.mxu0 0.0
      %228 = vmatpush2.xpose.msra.mxu0 0.0
      %229 = vmatprep.subr.mxu0 0.0
      %230 = vmatpush2.xpose.msra.mxu0 0.0
      %231 = vmatprep.subr.mxu0 0.0
      %232 = vmatpush2.xpose.msra.mxu0 0.0
      %233 = vmatprep.subr.mxu0 0.0
      %234 = vmatpush2.xpose.msra.mxu0 0.0
      %235 = vmatprep.subr.mxu0 0.0
      %236 = vmatpush2.xpose.msra.mxu0 0.0
      %237 = vmatprep.subr.mxu0 0.0
      %238 = vmatpush2.xpose.msra.mxu0 0.0
      %239 = vmatprep.subr.mxu0 0.0
      %240 = vmatpush2.xpose.msra.mxu0 0.0
      %241 = vmatprep.subr.mxu0 0.0
      %242 = vmatpush2.xpose.msra.mxu0 0.0
      %243 = vmatprep.subr.mxu0 0.0
      %244 = vmatpush2.xpose.msra.mxu0 0.0
      %245 = vmatprep.subr.mxu0 0.0
      %246 = vmatpush2.xpose.msra.mxu0 0.0
      %247 = vmatprep.subr.mxu0 0.0
      %248 = vmatpush2.xpose.msra.mxu0 0.0
      %249 = vmatprep.subr.mxu0 0.0
      %250 = vmatpush2.xpose.msra.mxu0 0.0
      %251 = vmatprep.subr.mxu0 0.0
      %252 = vmatpush2.xpose.msra.mxu0 0.0
      %253 = vmatprep.subr.mxu0 0.0
      %254 = vmatpush2.xpose.msra.mxu0 0.0
      %255 = vmatprep.subr.mxu0 0.0
      %256 = vmatpush2.xpose.msra.mxu0 0.0
      %257 = vmatprep.subr.mxu0 0.0
      %258 = vmatpush2.xpose.msra.mxu0 0.0
      %259 = vmatprep.mubr.f32.mxu0 0.0
      %260 = vmatmul.mubr.f32.gmra.mxu0 %v166
      %v261 = vpop.f32.mrf.mxu0
      %v262 = vadd.f32 0.0, %v261
      %v263 = vpop.f32.mrf.mxu0
      %264 = vmatprep.mubr.f32.mxu0 0.0
      %265 = vmatmul.mubr.f32.gmra.mxu0 %v169
      %v266 = vpop.f32.mrf.mxu0
      %v267 = vadd.f32 0.0, %v266
      %v268 = vpop.f32.mrf.mxu0
      %269 = vdwg.mxu0
      %v270 = vld [vmem:[#allocation2] sm:$0xff]
      %v271 = vld [vmem:[#allocation2 + $0x8] sm:$0xff]
      %v272 = vmul.f32 %v262, 0.25
      %v273 = vmul.f32 %v267, 0.25
      %v274 = vadd.f32 %v270, %v272
      %v275 = vadd.f32 %v271, %v273
      %v276 = vld [vmem:[%s4] sm:$0x1]
      %v278 = vlaneseq
      %v279 = vshrl.u32 %v278, 7
      %v280 = vsub.s32 0, %v279
      %v281 = vrot.slane %v276, %v280
      %v283 = vadd.f32 %v274, %v281
      %v284 = vadd.f32 %v275, %v281
      %285 = vst.msk [vmem:[#allocation3] sm:$0xff] %vm148, %v283
      %286 = vst.msk [vmem:[#allocation3 + $0x8] sm:$0xff] %vm148, %v284
    $region29: #{tpu_custom_call.1} parent=1 // pred_fallthru
      _
    // Predicated region
    $region30: #{tpu_custom_call.1} parent=1 // pred_check
      _
    $region31: #{tpu_custom_call.1} parent=1 // pred_check_branch
      %288 = sbr.rel (0) target = $region33
    $region32: #{tpu_custom_call.1} parent=1 // pred_region
      %s290 = ssub.s32 256, 256
      %291 = vsyncadd [#allocation4], %s290
      %s292 = sshll.u32 [#allocation3], 4
      %s293 = int_to_ptr.vmem [resolvable:$true] %s292
      %298 = dma.vmem_to_hbm [thread:$0]  %s293, 256, %s5, [#allocation4], 128, 128, 8
    $region33: #{tpu_custom_call.1} parent=1 // pred_fallthru
      _
    // Predicated region
    $region34: #{tpu_custom_call.1} parent=1 // pred_check
      _
    $region35: #{tpu_custom_call.1} parent=1 // pred_check_branch
      %300 = sbr.rel (0) target = $region37
    $region36: #{tpu_custom_call.1} parent=1 // pred_region
      %301 = dma.done [#allocation4], 256
    $region37: #{tpu_custom_call.1} parent=1 // pred_fallthru
      _
    %302 = vsyncpa [#allocation4], 1

</llo_original>
